<compile_context>
chip_gen: v6e
topology: v6e:2x2x1
jax: 0.10.0
libtpu: 0.0.40
codegen_flags: <defaults>
</compile_context>

<pallas_src>
import functools

import jax
import jax.numpy as jnp
from jax.experimental import pallas as pl
from jax.experimental.pallas import tpu as pltpu


def _round_up(a, m):
    return (a + m - 1) // m * m


def _choose_tb(n, c, itemsize):
    """Pick a batch-tile size: ~4 MiB per x tile, multiple of 16, <= 1024."""
    target_bytes = 4 * 1024 * 1024
    tb = max(16, target_bytes // max(1, c * itemsize))
    tb = int(min(tb, 1024))
    tb = min(tb, max(n, 1))
    return _round_up(tb, 16)


def _prior_ce_kernel(x_ref, y_ref, logprior_ref, out_ref, *, n_valid, tb):
    i = pl.program_id(0)

    x = x_ref[...].astype(jnp.float32)                # (TB, C), math in f32
    logits = x + logprior_ref[...]                    # (1, C) prior broadcast

    # Numerically stable logsumexp per row.
    m = jnp.max(logits, axis=-1, keepdims=True)       # (TB, 1)
    lse = m + jnp.log(jnp.sum(jnp.exp(logits - m), axis=-1, keepdims=True))

    # Pick the target logit via compare + select + reduce (no float one-hot).
    y = y_ref[...]                                    # (TB, 1) int32
    cls_ids = jax.lax.broadcasted_iota(jnp.int32, logits.shape, 1)
    picked = jnp.sum(jnp.where(cls_ids == y, logits, 0.0),
                     axis=-1, keepdims=True)          # (TB, 1)

    nll = lse - picked                                # (TB, 1) per-example NLL

    # Zero out rows belonging to batch padding (last partial tile).
    row_ids = i * tb + jax.lax.broadcasted_iota(jnp.int32, nll.shape, 0)
    out_ref[...] = jnp.where(row_ids < n_valid, nll, 0.0)


@functools.partial(jax.jit, static_argnames=("tb",))
def prior_ce_loss(x, y, prior, tb=None):
    """x: (N, C) float (f32 or bf16), y: (N,) int, prior: (C,). Returns scalar."""
    n, c = x.shape
    log_prior = jnp.log(prior.astype(jnp.float32) + 1e-9).reshape(1, c)

    itemsize = jnp.dtype(x.dtype).itemsize
    if tb is None:
        tb = _choose_tb(n, c, itemsize)
    n_pad = _round_up(n, tb)
    if n_pad != n:
        x = jnp.pad(x, ((0, n_pad - n), (0, 0)))
        y = jnp.pad(y, (0, n_pad - n))
    y2 = y.astype(jnp.int32).reshape(n_pad, 1)
    grid = n_pad // tb

    kernel = functools.partial(_prior_ce_kernel, n_valid=n, tb=tb)

    per_example = pl.pallas_call(
        kernel,
        out_shape=jax.ShapeDtypeStruct((n_pad, 1), jnp.float32),
        grid=(grid,),
        in_specs=[
            pl.BlockSpec((tb, c), lambda i: (i, 0)),   # x tile
            pl.BlockSpec((tb, 1), lambda i: (i, 0)),   # y tile
            pl.BlockSpec((1, c), lambda i: (0, 0)),    # log-prior: resident
        ],
        out_specs=pl.BlockSpec((tb, 1), lambda i: (i, 0)),
        compiler_params=pltpu.CompilerParams(
            dimension_semantics=("parallel",),
            vmem_limit_bytes=48 * 1024 * 1024,
        ),
    )(x, y2, log_prior)

    # Finish the mean outside the kernel with the true batch size.
    return jnp.sum(per_example) * (1.0 / n)


def make_prior(num_classes, img_max=100.0, imb_factor=0.1):
    """Deterministic stand-in for calculate_prior: exponential long-tailed counts."""
    # TODO(synk): calculate_prior's dataset/txt-file driven counts have no
    # in-kernel equivalent; a deterministic long-tailed prior is used instead.
    idx = jnp.arange(num_classes, dtype=jnp.float32)
    img_num_per_cls = img_max * (imb_factor ** (idx / max(num_classes - 1, 1)))
    return img_num_per_cls / jnp.sum(img_num_per_cls)


def _reference(x, y, prior):
    logits = x.astype(jnp.float32) + jnp.log(prior.astype(jnp.float32) + 1e-9)[None, :]
    logp = jax.nn.log_softmax(logits, axis=-1)
    return -jnp.mean(jnp.take_along_axis(logp, y[:, None], axis=-1))


if __name__ == "__main__":
    key = jax.random.PRNGKey(0)

    # Test 1: small single-tile case (batch=8, classes=16), f32.
    num_classes, batch = 16, 8
    kx, ky, k2x, k2y = jax.random.split(key, 4)
    x = jax.random.normal(kx, (batch, num_classes), dtype=jnp.float32)
    y = jax.random.randint(ky, (batch,), 0, num_classes, dtype=jnp.int32)
    prior = make_prior(num_classes)
    loss = prior_ce_loss(x, y, prior)
    jax.block_until_ready(loss)
    ref = _reference(x, y, prior)
    assert jnp.allclose(loss, ref, atol=1e-5, rtol=1e-5), (loss, ref)

    # Test 2: forced tiling (tb=16) with a padded last tile (batch=40, C=128).
    nc2, b2 = 128, 40
    x2 = jax.random.normal(k2x, (b2, nc2), dtype=jnp.float32)
    y2 = jax.random.randint(k2y, (b2,), 0, nc2, dtype=jnp.int32)
    prior2 = make_prior(nc2)
    loss2 = prior_ce_loss(x2, y2, prior2, tb=16)
    jax.block_until_ready(loss2)
    ref2 = _reference(x2, y2, prior2)
    assert jnp.allclose(loss2, ref2, atol=1e-5, rtol=1e-5), (loss2, ref2)

    # Test 3: bf16 input path (halves HBM traffic; in-kernel math stays f32).
    x2_bf16 = x2.astype(jnp.bfloat16)
    loss3 = prior_ce_loss(x2_bf16, y2, prior2, tb=16)
    jax.block_until_ready(loss3)
    ref3 = _reference(x2_bf16, y2, prior2)
    assert jnp.allclose(loss3, ref3, atol=1e-5, rtol=1e-5), (loss3, ref3)

    print("KERNEL_OK")
</pallas_src>

<mosaic_0001>
module attributes {stable_mosaic.version = 11 : i64} {
  func.func @_prior_ce_kernel(%arg0: i32, %arg1: memref<16x16xf32, #tpu.memory_space<vmem>>, %arg2: memref<16x1xi32, #tpu.memory_space<vmem>>, %arg3: memref<1x16xf32, #tpu.memory_space<vmem>>, %arg4: memref<16x1xf32, #tpu.memory_space<vmem>>) attributes {dimension_semantics = [#tpu.dimension_semantics<parallel>], iteration_bounds = array<i64: 1>, scalar_prefetch = 0 : i64, scratch_operands = 0 : i64, tpu.core_type = #tpu.core_type<tc>, window_params = [{transform_indices = @transform_0, window_bounds = array<i64: 16, 16>}, {transform_indices = @transform_1, window_bounds = array<i64: 16, 1>}, {pipeline_mode = #tpu.pipeline_mode<synchronous>, transform_indices = @transform_2, window_bounds = array<i64: 1, 16>}, {transform_indices = @transform_3, window_bounds = array<i64: 16, 1>}]} {
    %c0 = arith.constant 0 : index
    %c0_0 = arith.constant 0 : index
    %0 = vector.load %arg1[%c0, %c0_0] : memref<16x16xf32, #tpu.memory_space<vmem>>, vector<16x16xf32>
    %c0_1 = arith.constant 0 : index
    %c0_2 = arith.constant 0 : index
    %1 = vector.load %arg3[%c0_1, %c0_2] : memref<1x16xf32, #tpu.memory_space<vmem>>, vector<1x16xf32>
    %2 = vector.broadcast %1 : vector<1x16xf32> to vector<16x16xf32>
    %3 = arith.addf %0, %2 : vector<16x16xf32>
    %cst = arith.constant dense<0xFF800000> : vector<16xf32>
    %4 = vector.multi_reduction <maximumf>, %3, %cst [1] : vector<16x16xf32> to vector<16xf32>
    %5 = vector.shape_cast %4 : vector<16xf32> to vector<16x1xf32>
    %6 = vector.broadcast %5 : vector<16x1xf32> to vector<16x16xf32>
    %7 = arith.subf %3, %6 : vector<16x16xf32>
    %8 = math.exp %7 : vector<16x16xf32>
    %cst_3 = arith.constant dense<0.000000e+00> : vector<16xf32>
    %9 = vector.multi_reduction <add>, %8, %cst_3 [1] : vector<16x16xf32> to vector<16xf32>
    %10 = vector.shape_cast %9 : vector<16xf32> to vector<16x1xf32>
    %11 = math.log %10 : vector<16x1xf32>
    %12 = arith.addf %5, %11 : vector<16x1xf32>
    %c0_4 = arith.constant 0 : index
    %c0_5 = arith.constant 0 : index
    %13 = vector.load %arg2[%c0_4, %c0_5] : memref<16x1xi32, #tpu.memory_space<vmem>>, vector<16x1xi32>
    %14 = tpu.iota {dimensions = array<i32: 1>} : vector<16x16xi32>
    %15 = vector.broadcast %13 : vector<16x1xi32> to vector<16x16xi32>
    %16 = arith.cmpi eq, %14, %15 : vector<16x16xi32>
    %cst_6 = arith.constant 0.000000e+00 : f32
    %17 = vector.broadcast %cst_6 : f32 to vector<16x16xf32>
    %18 = arith.select %16, %3, %17 : vector<16x16xi1>, vector<16x16xf32>
    %cst_7 = arith.constant dense<0.000000e+00> : vector<16xf32>
    %19 = vector.multi_reduction <add>, %18, %cst_7 [1] : vector<16x16xf32> to vector<16xf32>
    %20 = vector.shape_cast %19 : vector<16xf32> to vector<16x1xf32>
    %21 = arith.subf %12, %20 : vector<16x1xf32>
    %c16_i32 = arith.constant 16 : i32
    %22 = arith.muli %arg0, %c16_i32 : i32
    %23 = tpu.iota {dimensions = array<i32: 0>} : vector<16x1xi32>
    %24 = vector.broadcast %22 : i32 to vector<16x1xi32>
    %25 = arith.addi %24, %23 : vector<16x1xi32>
    %c8_i32 = arith.constant 8 : i32
    %26 = vector.broadcast %c8_i32 : i32 to vector<16x1xi32>
    %27 = arith.cmpi slt, %25, %26 : vector<16x1xi32>
    %cst_8 = arith.constant 0.000000e+00 : f32
    %28 = vector.broadcast %cst_8 : f32 to vector<16x1xf32>
    %29 = arith.select %27, %21, %28 : vector<16x1xi1>, vector<16x1xf32>
    %c0_9 = arith.constant 0 : index
    %c0_10 = arith.constant 0 : index
    %30 = vector.load %arg4[%c0_9, %c0_10] : memref<16x1xf32, #tpu.memory_space<vmem>>, vector<16x1xf32>
    tpu.vector_store %arg4[%c0_9, %c0_10], %29 {strides = array<i32>} : memref<16x1xf32, #tpu.memory_space<vmem>>, vector<16x1xf32>,
    return
  }
  func.func @transform_0(%arg0: i32) -> (i32, i32) {
    %c0_i32 = arith.constant 0 : i32
    %c0_i32_0 = arith.constant 0 : i32
    return %arg0, %c0_i32 : i32, i32
  }
  func.func @transform_1(%arg0: i32) -> (i32, i32) {
    %c0_i32 = arith.constant 0 : i32
    %c0_i32_0 = arith.constant 0 : i32
    return %arg0, %c0_i32 : i32, i32
  }
  func.func @transform_2(%arg0: i32) -> (i32, i32) {
    %c0_i32 = arith.constant 0 : i32
    %c0_i32_0 = arith.constant 0 : i32
    %c0_i32_1 = arith.constant 0 : i32
    return %c0_i32, %c0_i32_0 : i32, i32
  }
  func.func @transform_3(%arg0: i32) -> (i32, i32) {
    %c0_i32 = arith.constant 0 : i32
    %c0_i32_0 = arith.constant 0 : i32
    return %arg0, %c0_i32 : i32, i32
  }
}

</mosaic_0001>

<llo_original>
// kernel: prior_ce_loss.1
$region0: #{prior_ce_loss.1}
  #allocation0 [shape = 'u32[]', space=smem, size = 0x4, offset = 0x4, fixed_abs, tag = 'smem constant byte address 0x4 - core index']
  #allocation1 [shape = 'u32[144,128]{1,0:T(1,128)}', space=vmem, size = 0x12000, scoped, tag = 'internal scratch']
  %s0 = inlined_call_operand.vmem [shape: f32[16,16], index: 0, kind: input, shape index: {}]
  %s1 = inlined_call_operand.vmem [shape: s32[16,1], index: 1, kind: input, shape index: {}]
  %s2 = inlined_call_operand.vmem [shape: f32[1,16], index: 2, kind: input, shape index: {}]
  %s3 = inlined_call_operand.vmem [shape: f32[16,1], index: 3, kind: output, shape index: {}]
  %s4 = sld [smem:[#allocation0]]
  $region22: #{prior_ce_loss.1} parent=0
    _
  %s6 = ssub.s32 1, %s4
  %s7 = scalar_select 0, %s6, %s4
  // Predicated region
  $region2: #{prior_ce_loss.1} parent=0 // pred_check
    _
  $region3: #{prior_ce_loss.1} parent=0 // pred_check_branch
    %9 = sbr.rel (0) target = $region5
  $region4: #{prior_ce_loss.1} parent=0 // pred_region
    _
  $region5: #{prior_ce_loss.1} parent=0 // pred_fallthru
    _
  // Predicated region
  $region6: #{prior_ce_loss.1} parent=0 // pred_check
    _
  $region7: #{prior_ce_loss.1} parent=0 // pred_check_branch
    %11 = sbr.rel (0) target = $region9
  $region8: #{prior_ce_loss.1} parent=0 // pred_region
    _
  $region9: #{prior_ce_loss.1} parent=0 // pred_fallthru
    _
  // Predicated region
  $region10: #{prior_ce_loss.1} parent=0 // pred_check
    _
  $region11: #{prior_ce_loss.1} parent=0 // pred_check_branch
    %13 = sbr.rel (0) target = $region13
  $region12: #{prior_ce_loss.1} parent=0 // pred_region
    _
  $region13: #{prior_ce_loss.1} parent=0 // pred_fallthru
    _
  %v14 = vld [vmem:[%s0] sm:$0xff]
  %v15 = vld [vmem:[%s0 + $0x8] sm:$0xff]
  %v16 = vld [vmem:[%s2] sm:$0x1]
  %v18 = vlaneseq
  %v19 = vshrl.u32 %v18, 7
  %v20 = vsub.s32 0, %v19
  %v21 = vrot.slane %v16, %v20
  %v23 = vadd.f32 %v14, %v21
  %v24 = vadd.f32 %v15, %v21
  %vm25 = vcmask 130048
  %v26 = vsel %vm25, %v23, -inf
  %27 = vmax.xlane.f32.xlu0 %v26
  %v28 = vpop.xlane.xlu0 %27
  %v29 = vsel %vm25, %v24, -inf
  %30 = vmax.xlane.f32.xlu0 %v29
  %v31 = vpop.xlane.xlu0 %30
  %v32 = vsub.f32 %v23, %v28
  %v33 = vsub.f32 %v24, %v31
  %v34 = vmul.f32 %v32, 1.442695
  %v35 = vpow.pop %v34
  %v36 = vmul.f32 %v33, 1.442695
  %v37 = vpow.pop %v36
  %v38 = vsel %vm25, %v35, 0.0
  %39 = vadd.xlane.f32.xlu0 %v38
  %v40 = vpop.xlane.xlu0 %39
  %v41 = vsel %vm25, %v37, 0.0
  %42 = vadd.xlane.f32.xlu0 %v41
  %v43 = vpop.xlane.xlu0 %42
  %v44 = vlog2.pop %v40
  %v45 = vmul.f32 %v44, 0.6931472
  %v46 = vlog2.pop %v43
  %v47 = vmul.f32 %v46, 0.6931472
  %v48 = vadd.f32 %v28, %v45
  %v49 = vadd.f32 %v31, %v47
  %v50 = vld [vmem:[%s1] sm:$0xff]
  %v51 = vld [vmem:[%s1 + $0x8] sm:$0xff]
  %v52 = vlaneseq
  %v53 = vand.u32 %v52, 127
  %54 = vset.pattern.permute.xlu0 0
  %55 = vperm.xlu0 %54, %v50
  %v56 = vpop.permute.xlu0 %55
  %57 = vset.pattern.permute.xlu0 0
  %58 = vperm.xlu0 %57, %v51
  %v59 = vpop.permute.xlu0 %58
  %vm60 = vcmp.eq.s32.totalorder %v53, %v56
  %vm61 = vcmp.eq.s32.totalorder %v53, %v59
  %v62 = vsel %vm60, %v23, 0.0
  %v63 = vsel %vm61, %v24, 0.0
  %v64 = vsel %vm25, %v62, 0.0
  %65 = vadd.xlane.f32.xlu0 %v64
  %v66 = vpop.xlane.xlu0 %65
  %v67 = vsel %vm25, %v63, 0.0
  %68 = vadd.xlane.f32.xlu0 %v67
  %v69 = vpop.xlane.xlu0 %68
  %v70 = vsub.f32 %v48, %v66
  %v71 = vsub.f32 %v49, %v69
  %s72 = smul.u32 0, 16
  %v73 = vlaneseq
  %v74 = vshrl.u32 %v73, 7
  %v75 = vadd.s32 %v74, 8
  %v76 = vstv %s72
  %v77 = vadd.s32 %v76, %v74
  %v78 = vadd.s32 %v76, %v75
  %vm79 = vcmp.lt.s32.totalorder %v77, 8
  %vm80 = vcmp.lt.s32.totalorder %v78, 8
  %v81 = vsel %vm79, %v70, 0.0
  %v82 = vsel %vm80, %v71, 0.0
  %vm83 = vcmask 7168
  %84 = vst.msk [vmem:[%s3] sm:$0xff] %vm83, %v81
  %85 = vst.msk [vmem:[%s3 + $0x8] sm:$0xff] %vm83, %v82
  // Predicated region
  $region14: #{prior_ce_loss.1} parent=0 // pred_check
    _
  $region15: #{prior_ce_loss.1} parent=0 // pred_check_branch
    %87 = sbr.rel (0) target = $region17
  $region16: #{prior_ce_loss.1} parent=0 // pred_region
    _
  $region17: #{prior_ce_loss.1} parent=0 // pred_fallthru
    _
  // Predicated region
  $region18: #{prior_ce_loss.1} parent=0 // pred_check
    _
  $region19: #{prior_ce_loss.1} parent=0 // pred_check_branch
    %89 = sbr.rel (0) target = $region21
  $region20: #{prior_ce_loss.1} parent=0 // pred_region
    _
  $region21: #{prior_ce_loss.1} parent=0 // pred_fallthru
    _

</llo_original>
